<compile_context>
chip_gen: v5e
topology: v5e:2x2
jax: 0.10.0
libtpu: 0.0.40
codegen_flags: <defaults>
</compile_context>

<pallas_src>
import functools
import math

import jax
import jax.numpy as jnp
from jax.experimental import pallas as pl
from jax.experimental.pallas import tpu as pltpu


def _round_up(x, m):
    return ((x + m - 1) // m) * m


def _time_embedding_kernel(t_ref, f_ref, o_ref, *, half_pad):
    """t_ref: (TB, 1) f32; f_ref: (1, half_pad) f32; o_ref: (TB, 2*half_pad) f32."""
    emb = t_ref[...] * f_ref[...]                      # (TB, half_pad), VPU broadcast-mul
    # Two lane-aligned slice stores (half_pad % 128 == 0 -> unmasked vst).
    o_ref[:, :half_pad] = jnp.sin(emb).astype(o_ref.dtype)
    o_ref[:, half_pad:] = jnp.cos(emb).astype(o_ref.dtype)


@functools.partial(jax.jit, static_argnames=("dim",))
def time_embedding(t, dim):
    """Pallas equivalent of TimeEmbedding(dim).forward(t); t: (B,) -> (B, dim) f32."""
    assert dim % 2 == 0, "TimeEmbedding requires an even dim"
    half_dim = dim // 2
    # PyTorch formula divides by (half_dim - 1); dim == 2 is undefined there too.
    assert half_dim >= 2, "TimeEmbedding requires dim >= 4"
    B = t.shape[0]

    # Lane-dense padded layout: pad the half-dim axis up to a multiple of 128.
    half_pad = _round_up(half_dim, 128)

    # Frequency table computed once here (constant-folded by XLA), padded
    # entries are sliced away below so their values are irrelevant.
    k = jnp.arange(half_pad, dtype=jnp.float32)
    freqs = jnp.exp(-math.log(10000.0) * k / float(half_dim - 1)).reshape(1, half_pad)

    # Row tiling over B. TB capped so 2x double-buffered (TB, 2*half_pad) f32
    # output tiles fit comfortably in VMEM on every generation (incl. v7x).
    TB = min(1024, _round_up(B, 8))
    B_pad = _round_up(B, TB)
    grid_b = B_pad // TB

    t2 = jnp.pad(t.astype(jnp.float32).reshape(B, 1), ((0, B_pad - B), (0, 0)))

    kernel = functools.partial(_time_embedding_kernel, half_pad=half_pad)
    out_shape = jax.ShapeDtypeStruct((B_pad, 2 * half_pad), jnp.float32)

    if grid_b == 1:
        # Tiny-B fast path: no grid, whole arrays resident in VMEM.
        out = pl.pallas_call(
            kernel,
            out_shape=out_shape,
            in_specs=[
                pl.BlockSpec(memory_space=pltpu.MemorySpace.VMEM),
                pl.BlockSpec(memory_space=pltpu.MemorySpace.VMEM),
            ],
            out_specs=pl.BlockSpec(memory_space=pltpu.MemorySpace.VMEM),
        )(t2, freqs)
    else:
        # Large-B path: parallel grid over row tiles (shards across TCs on v7x)
        # with default double-buffering overlapping the output writeback.
        out = pl.pallas_call(
            kernel,
            out_shape=out_shape,
            grid=(grid_b,),
            in_specs=[
                pl.BlockSpec((TB, 1), lambda i: (i, 0)),
                pl.BlockSpec((1, half_pad), lambda i: (0, 0)),
            ],
            out_specs=pl.BlockSpec((TB, 2 * half_pad), lambda i: (i, 0)),
            compiler_params=pltpu.CompilerParams(
                dimension_semantics=("parallel",)),
        )(t2, freqs)

    # (B_pad, 2*half_pad) -> (B, dim): drop row/lane padding, keep [sin | cos] order.
    return out.reshape(B_pad, 2, half_pad)[:B, :, :half_dim].reshape(B, dim)


def _reference_time_embedding(t, dim):
    """Pure-JAX reference mirroring the PyTorch module exactly."""
    half_dim = dim // 2
    freqs = jnp.exp(
        -math.log(10000.0)
        * jnp.arange(half_dim, dtype=jnp.float32)
        / float(half_dim - 1)
    )
    emb = t[:, None] * freqs[None, :]
    return jnp.concatenate([jnp.sin(emb), jnp.cos(emb)], axis=1)


if __name__ == "__main__":
    # Test 1: dim=32 (half_dim=16 -> lane-padded layout path).
    B, dim = 8, 32
    t = jax.random.uniform(jax.random.PRNGKey(0), (B,), jnp.float32, 0.0, 10.0)
    out = jax.block_until_ready(time_embedding(t, dim))
    ref = _reference_time_embedding(t, dim)
    assert out.shape == (B, dim), out.shape
    assert jnp.allclose(out, ref, atol=1e-4, rtol=1e-4), (
        float(jnp.max(jnp.abs(out - ref)))
    )

    # Test 2: dim=256 (half_dim=128 -> already lane-dense, no padding).
    B2, dim2 = 8, 256
    t2 = jax.random.uniform(jax.random.PRNGKey(1), (B2,), jnp.float32, 0.0, 10.0)
    out2 = jax.block_until_ready(time_embedding(t2, dim2))
    ref2 = _reference_time_embedding(t2, dim2)
    assert out2.shape == (B2, dim2), out2.shape
    assert jnp.allclose(out2, ref2, atol=1e-4, rtol=1e-4), (
        float(jnp.max(jnp.abs(out2 - ref2)))
    )

    print("KERNEL_OK")
</pallas_src>

<mosaic_0001>
module attributes {stable_mosaic.version = 11 : i64} {
  func.func @_time_embedding_kernel(%arg0: memref<8x1xf32, #tpu.memory_space<vmem>>, %arg1: memref<1x128xf32, #tpu.memory_space<vmem>>, %arg2: memref<8x256xf32, #tpu.memory_space<vmem>>) attributes {dimension_semantics = [], scalar_prefetch = 0 : i64, scratch_operands = 0 : i64, tpu.core_type = #tpu.core_type<tc>} {
    %c0 = arith.constant 0 : index
    %c0_0 = arith.constant 0 : index
    %0 = vector.load %arg0[%c0, %c0_0] : memref<8x1xf32, #tpu.memory_space<vmem>>, vector<8x1xf32>
    %c0_1 = arith.constant 0 : index
    %c0_2 = arith.constant 0 : index
    %1 = vector.load %arg1[%c0_1, %c0_2] : memref<1x128xf32, #tpu.memory_space<vmem>>, vector<1x128xf32>
    %2 = vector.broadcast %0 : vector<8x1xf32> to vector<8x128xf32>
    %3 = vector.broadcast %1 : vector<1x128xf32> to vector<8x128xf32>
    %4 = arith.mulf %2, %3 : vector<8x128xf32>
    %5 = math.sin %4 : vector<8x128xf32>
    %c0_3 = arith.constant 0 : index
    %c0_4 = arith.constant 0 : index
    %6 = vector.load %arg2[%c0_3, %c0_4] : memref<8x256xf32, #tpu.memory_space<vmem>>, vector<8x128xf32>
    tpu.vector_store %arg2[%c0_3, %c0_4], %5 {strides = array<i32>} : memref<8x256xf32, #tpu.memory_space<vmem>>, vector<8x128xf32>,
    %7 = math.cos %4 : vector<8x128xf32>
    %c0_5 = arith.constant 0 : index
    %c128 = arith.constant 128 : index
    %8 = vector.load %arg2[%c0_5, %c128] : memref<8x256xf32, #tpu.memory_space<vmem>>, vector<8x128xf32>
    tpu.vector_store %arg2[%c0_5, %c128], %7 {strides = array<i32>} : memref<8x256xf32, #tpu.memory_space<vmem>>, vector<8x128xf32>,
    return
  }
}

</mosaic_0001>

<llo_original>
// kernel: time_embedding.1
$region0: #{time_embedding.1}
  #allocation0 [shape = 'u32[]', space=smem, size = 0x4, offset = 0x4, fixed_abs, tag = 'smem constant byte address 0x4 - core index']
  #allocation1 [shape = 'u32[72,128]{1,0:T(1,128)}', space=vmem, size = 0x9000, scoped, tag = 'internal scratch']
  %s0 = inlined_call_operand.vmem [shape: f32[8,1], index: 0, kind: input, shape index: {}]
  %s1 = inlined_call_operand.vmem [shape: f32[1,128], index: 1, kind: input, shape index: {}]
  %s2 = inlined_call_operand.vmem [shape: f32[8,256], index: 2, kind: output, shape index: {}]
  %s3 = sld [smem:[#allocation0]]
  $region18: #{time_embedding.1} parent=0
    _
  %s5 = ssub.s32 1, %s3
  %s6 = scalar_select 0, %s5, %s3
  // Predicated region
  $region2: #{time_embedding.1} parent=0 // pred_check
    _
  $region3: #{time_embedding.1} parent=0 // pred_check_branch
    %8 = sbr.rel (0) target = $region5
  $region4: #{time_embedding.1} parent=0 // pred_region
    _
  $region5: #{time_embedding.1} parent=0 // pred_fallthru
    _
  // Predicated region
  $region6: #{time_embedding.1} parent=0 // pred_check
    _
  $region7: #{time_embedding.1} parent=0 // pred_check_branch
    %10 = sbr.rel (0) target = $region9
  $region8: #{time_embedding.1} parent=0 // pred_region
    _
  $region9: #{time_embedding.1} parent=0 // pred_fallthru
    _
  %v11 = vld [vmem:[%s0] sm:$0xff]
  %v12 = vld [vmem:[%s1] sm:$0x1]
  %14 = vset.pattern.permute.xlu0 0
  %15 = vperm.xlu0 %14, %v11
  %v16 = vpop.permute.xlu0 %15
  %v19 = vperm.slane %v12, 0
  %v21 = vmul.f32 %v16, %v19
  %v22 = vand.u32 2147483647, %v21
  %vm23 = vcmp.le.f32.partialorder %v22, 0.7853982
  %vm24 = vcmp.lt.s32.totalorder %v21, 0
  %v25 = vand.u32 %v21, 2139095040
  %v26 = vshrl.u32 %v25, 23
  %v27 = vsub.s32 %v26, 127
  %v28 = vand.u32 2147483647, %v21
  %v29 = vand.u32 %v28, 8388607
  %v30 = vor.u32 %v29, 8388608
  %v31 = vsub.s32 0, %v30
  %v32 = vadd.s32 %v27, 1
  %vm33 = vcmp.gt.s32.totalorder %v32, 0
  %v34 = vsel %vm33, %v32, 0
  %v35 = vshrl.u32 %v34, 5
  %v36 = vand.u32 %v34, 31
  %v37 = vsub.s32 32, %v36
  %v38 = vshrl.u32 683565275, %v37
  %v39 = vshll.u32 683565275, %v36
  %v40 = vshrl.u32 2475754826, %v37
  %v41 = vor.u32 %v39, %v40
  %v42 = vshll.u32 2475754826, %v36
  %v43 = vshrl.u32 2131351028, %v37
  %v44 = vor.u32 %v42, %v43
  %v45 = vshll.u32 2131351028, %v36
  %v46 = vshrl.u32 2102212464, %v37
  %v47 = vor.u32 %v45, %v46
  %v48 = vshll.u32 2102212464, %v36
  %v49 = vshrl.u32 920167782, %v37
  %v50 = vor.u32 %v48, %v49
  %v51 = vshll.u32 920167782, %v36
  %v52 = vshrl.u32 1326507024, %v37
  %v53 = vor.u32 %v51, %v52
  %vm54 = vcmp.lt.s32.totalorder %v35, 1
  %vm55 = vcmp.lt.s32.totalorder %v35, 2
  %vm56 = vcmp.lt.s32.totalorder %v35, 3
  %vm57 = vcmp.lt.s32.totalorder %v35, 4
  %v58 = vsel %vm54, %v38, %v41
  %v59 = vsel %vm57, %v47, 2102212464
  %v60 = vsel %vm56, %v44, %v59
  %v61 = vsel %vm55, %v58, %v60
  %v62 = vsel %vm54, %v41, %v44
  %v63 = vsel %vm57, %v50, 920167782
  %v64 = vsel %vm56, %v47, %v63
  %v65 = vsel %vm55, %v62, %v64
  %v66 = vsel %vm54, %v44, %v47
  %v67 = vsel %vm57, %v53, 1326507024
  %v68 = vsel %vm56, %v50, %v67
  %v69 = vsel %vm55, %v66, %v68
  %v70 = vshll.u32 %v30, 8
  %v71 = vand.u32 %v70, 65535
  %v72 = vshrl.u32 %v70, 16
  %v73 = vand.u32 %v69, 65535
  %v74 = vshrl.u32 %v69, 16
  %v75 = vmul.u32 %v71, %v73
  %v76 = vmul.u32 %v71, %v74
  %v77 = vmul.u32 %v72, %v73
  %v78 = vmul.u32 %v72, %v74
  %v79 = vshll.u32 %v76, 16
  %v80 = vshrl.u32 %v76, 16
  %v81 = vshll.u32 %v77, 16
  %v82 = vshrl.u32 %v77, 16
  %vm83 = vc.u32 %v75, %v79
  %v84 = vsel %vm83, 1, 0
  %v85 = vadd.s32 %v75, %v79
  %v86 = vadd.s32 %v78, %v84
  %vm87 = vc.u32 %v85, %v81
  %v88 = vsel %vm87, 1, 0
  %v89 = vadd.s32 %v85, %v81
  %v90 = vadd.s32 %v86, %v88
  %v91 = vadd.s32 %v90, %v80
  %v92 = vadd.s32 %v91, %v82
  %v93 = vand.u32 %v70, 65535
  %v94 = vshrl.u32 %v70, 16
  %v95 = vand.u32 %v65, 65535
  %v96 = vshrl.u32 %v65, 16
  %v97 = vmul.u32 %v93, %v95
  %v98 = vmul.u32 %v93, %v96
  %v99 = vmul.u32 %v94, %v95
  %v100 = vmul.u32 %v94, %v96
  %v101 = vshll.u32 %v98, 16
  %v102 = vshrl.u32 %v98, 16
  %v103 = vshll.u32 %v99, 16
  %v104 = vshrl.u32 %v99, 16
  %vm105 = vc.u32 %v97, %v101
  %v106 = vsel %vm105, 1, 0
  %v107 = vadd.s32 %v97, %v101
  %v108 = vadd.s32 %v100, %v106
  %vm109 = vc.u32 %v107, %v103
  %v110 = vsel %vm109, 1, 0
  %v111 = vadd.s32 %v107, %v103
  %v112 = vadd.s32 %v108, %v110
  %v113 = vadd.s32 %v112, %v102
  %v114 = vadd.s32 %v113, %v104
  %v115 = vmul.u32 %v70, %v61
  %v116 = vadd.s32 %v92, %v111
  %vm117 = vc.u32 %v92, %v111
  %v118 = vadd.s32 %v114, 1
  %v119 = vsel %vm117, %v118, %v114
  %v120 = vadd.s32 %v115, %v119
  %v121 = vadd.s32 %v120, 536870912
  %v122 = vshrl.u32 %v121, 30
  %v123 = vshll.u32 %v122, 30
  %v124 = vsub.s32 %v120, %v123
  %vm125 = vcmp.lt.s32.totalorder %v124, 0
  %v126 = vsub.s32 0, %v124
  %v127 = vsel %vm125, %v126, %v124
  %v128 = vclz %v127
  %v129 = vsub.s32 %v128, 2
  %vm130 = vcmp.gt.s32.totalorder 0, %v129
  %v131 = vsel %vm130, 0, %v129
  %v132 = vsub.s32 32, %v131
  %v133 = vshll.u32 %v124, %v131
  %v134 = vshrl.u32 %v116, %v132
  %v135 = vor.u32 %v133, %v134
  %v136 = vsub.s32 4294967266, %v131
  %v137 = vadd.s32 %v136, 127
  %v138 = vshll.u32 %v137, 23
  %v139 = vor.u32 4788187, %v138
  %v140 = vand.u32 2147483647, %v139
  %v142 = vcvt.s32.f32 %v135
  %v143 = vmul.f32 %v142, %v140
  %v144 = vxor.u32 %v143, 2147483648
  %v145 = vsel %vm24, %v144, %v143
  %v146 = vsub.s32 4, %v122
  %v147 = vsel %vm24, %v146, %v122
  %v148 = vsel %vm23, %v21, %v145
  %v149 = vsel %vm23, 0, %v147
  %v150 = vmul.f32 %v148, %v148
  %v151 = vmul.f32 %v150, -0.001358992
  %v152 = vadd.f32 %v151, 0.041655596
  %v153 = vmul.f32 %v150, %v152
  %v154 = vadd.f32 %v153, -0.4999988
  %v155 = vmul.f32 %v150, %v154
  %v156 = vadd.f32 1.0, %v155
  %v157 = vmul.f32 %v148, %v148
  %v158 = vmul.f32 %v157, -0.00019511016
  %v159 = vadd.f32 %v158, 0.008332121
  %v160 = vmul.f32 %v157, %v159
  %v161 = vadd.f32 %v160, -0.16666654
  %v162 = vmul.f32 %v157, %v161
  %v163 = vadd.f32 %v162, 1.0
  %v164 = vmul.f32 %v163, %v148
  %vm165 = vweird.f32 %v21
  %v166 = vadd.s32 %v149, 3
  %v167 = vand.u32 %v166, 3
  %vm168 = vcmp.lt.s32.totalorder %v167, 2
  %vm169 = vcmp.eq.s32.totalorder %v167, 0
  %v170 = vxor.u32 %v164, 2147483648
  %v171 = vsel %vm169, %v156, %v170
  %vm172 = vcmp.eq.s32.totalorder %v167, 2
  %v173 = vxor.u32 %v156, 2147483648
  %v174 = vsel %vm172, %v173, %v164
  %v175 = vsel %vm168, %v171, %v174
  %v176 = vsel %vm165, nan, %v175
  %177 = vst [vmem:[%s2] sm:$0xff] %v176
  %v178 = vand.u32 2147483647, %v21
  %vm179 = vcmp.le.f32.partialorder %v178, 0.7853982
  %vm180 = vcmp.lt.s32.totalorder %v21, 0
  %v181 = vand.u32 %v21, 2139095040
  %v182 = vshrl.u32 %v181, 23
  %v183 = vsub.s32 %v182, 127
  %v184 = vand.u32 2147483647, %v21
  %v185 = vand.u32 %v184, 8388607
  %v186 = vor.u32 %v185, 8388608
  %v187 = vsub.s32 0, %v186
  %v188 = vadd.s32 %v183, 1
  %vm189 = vcmp.gt.s32.totalorder %v188, 0
  %v190 = vsel %vm189, %v188, 0
  %v191 = vshrl.u32 %v190, 5
  %v192 = vand.u32 %v190, 31
  %v193 = vsub.s32 32, %v192
  %v194 = vshrl.u32 683565275, %v193
  %v195 = vshll.u32 683565275, %v192
  %v196 = vshrl.u32 2475754826, %v193
  %v197 = vor.u32 %v195, %v196
  %v198 = vshll.u32 2475754826, %v192
  %v199 = vshrl.u32 2131351028, %v193
  %v200 = vor.u32 %v198, %v199
  %v201 = vshll.u32 2131351028, %v192
  %v202 = vshrl.u32 2102212464, %v193
  %v203 = vor.u32 %v201, %v202
  %v204 = vshll.u32 2102212464, %v192
  %v205 = vshrl.u32 920167782, %v193
  %v206 = vor.u32 %v204, %v205
  %v207 = vshll.u32 920167782, %v192
  %v208 = vshrl.u32 1326507024, %v193
  %v209 = vor.u32 %v207, %v208
  %vm210 = vcmp.lt.s32.totalorder %v191, 1
  %vm211 = vcmp.lt.s32.totalorder %v191, 2
  %vm212 = vcmp.lt.s32.totalorder %v191, 3
  %vm213 = vcmp.lt.s32.totalorder %v191, 4
  %v214 = vsel %vm210, %v194, %v197
  %v215 = vsel %vm213, %v203, 2102212464
  %v216 = vsel %vm212, %v200, %v215
  %v217 = vsel %vm211, %v214, %v216
  %v218 = vsel %vm210, %v197, %v200
  %v219 = vsel %vm213, %v206, 920167782
  %v220 = vsel %vm212, %v203, %v219
  %v221 = vsel %vm211, %v218, %v220
  %v222 = vsel %vm210, %v200, %v203
  %v223 = vsel %vm213, %v209, 1326507024
  %v224 = vsel %vm212, %v206, %v223
  %v225 = vsel %vm211, %v222, %v224
  %v226 = vshll.u32 %v186, 8
  %v227 = vand.u32 %v226, 65535
  %v228 = vshrl.u32 %v226, 16
  %v229 = vand.u32 %v225, 65535
  %v230 = vshrl.u32 %v225, 16
  %v231 = vmul.u32 %v227, %v229
  %v232 = vmul.u32 %v227, %v230
  %v233 = vmul.u32 %v228, %v229
  %v234 = vmul.u32 %v228, %v230
  %v235 = vshll.u32 %v232, 16
  %v236 = vshrl.u32 %v232, 16
  %v237 = vshll.u32 %v233, 16
  %v238 = vshrl.u32 %v233, 16
  %vm239 = vc.u32 %v231, %v235
  %v240 = vsel %vm239, 1, 0
  %v241 = vadd.s32 %v231, %v235
  %v242 = vadd.s32 %v234, %v240
  %vm243 = vc.u32 %v241, %v237
  %v244 = vsel %vm243, 1, 0
  %v245 = vadd.s32 %v241, %v237
  %v246 = vadd.s32 %v242, %v244
  %v247 = vadd.s32 %v246, %v236
  %v248 = vadd.s32 %v247, %v238
  %v249 = vand.u32 %v226, 65535
  %v250 = vshrl.u32 %v226, 16
  %v251 = vand.u32 %v221, 65535
  %v252 = vshrl.u32 %v221, 16
  %v253 = vmul.u32 %v249, %v251
  %v254 = vmul.u32 %v249, %v252
  %v255 = vmul.u32 %v250, %v251
  %v256 = vmul.u32 %v250, %v252
  %v257 = vshll.u32 %v254, 16
  %v258 = vshrl.u32 %v254, 16
  %v259 = vshll.u32 %v255, 16
  %v260 = vshrl.u32 %v255, 16
  %vm261 = vc.u32 %v253, %v257
  %v262 = vsel %vm261, 1, 0
  %v263 = vadd.s32 %v253, %v257
  %v264 = vadd.s32 %v256, %v262
  %vm265 = vc.u32 %v263, %v259
  %v266 = vsel %vm265, 1, 0
  %v267 = vadd.s32 %v263, %v259
  %v268 = vadd.s32 %v264, %v266
  %v269 = vadd.s32 %v268, %v258
  %v270 = vadd.s32 %v269, %v260
  %v271 = vmul.u32 %v226, %v217
  %v272 = vadd.s32 %v248, %v267
  %vm273 = vc.u32 %v248, %v267
  %v274 = vadd.s32 %v270, 1
  %v275 = vsel %vm273, %v274, %v270
  %v276 = vadd.s32 %v271, %v275
  %v277 = vadd.s32 %v276, 536870912
  %v278 = vshrl.u32 %v277, 30
  %v279 = vshll.u32 %v278, 30
  %v280 = vsub.s32 %v276, %v279
  %vm281 = vcmp.lt.s32.totalorder %v280, 0
  %v282 = vsub.s32 0, %v280
  %v283 = vsel %vm281, %v282, %v280
  %v284 = vclz %v283
  %v285 = vsub.s32 %v284, 2
  %vm286 = vcmp.gt.s32.totalorder 0, %v285
  %v287 = vsel %vm286, 0, %v285
  %v288 = vsub.s32 32, %v287
  %v289 = vshll.u32 %v280, %v287
  %v290 = vshrl.u32 %v272, %v288
  %v291 = vor.u32 %v289, %v290
  %v292 = vsub.s32 4294967266, %v287
  %v293 = vadd.s32 %v292, 127
  %v294 = vshll.u32 %v293, 23
  %v295 = vor.u32 4788187, %v294
  %v296 = vand.u32 2147483647, %v295
  %v298 = vcvt.s32.f32 %v291
  %v299 = vmul.f32 %v298, %v296
  %v300 = vxor.u32 %v299, 2147483648
  %v301 = vsel %vm180, %v300, %v299
  %v302 = vsub.s32 4, %v278
  %v303 = vsel %vm180, %v302, %v278
  %v304 = vsel %vm179, %v21, %v301
  %v305 = vsel %vm179, 0, %v303
  %v306 = vmul.f32 %v304, %v304
  %v307 = vmul.f32 %v306, -0.001358992
  %v308 = vadd.f32 %v307, 0.041655596
  %v309 = vmul.f32 %v306, %v308
  %v310 = vadd.f32 %v309, -0.4999988
  %v311 = vmul.f32 %v306, %v310
  %v312 = vadd.f32 1.0, %v311
  %v313 = vmul.f32 %v304, %v304
  %v314 = vmul.f32 %v313, -0.00019511016
  %v315 = vadd.f32 %v314, 0.008332121
  %v316 = vmul.f32 %v313, %v315
  %v317 = vadd.f32 %v316, -0.16666654
  %v318 = vmul.f32 %v313, %v317
  %v319 = vadd.f32 %v318, 1.0
  %v320 = vmul.f32 %v319, %v304
  %vm321 = vweird.f32 %v21
  %v322 = vand.u32 %v305, 3
  %vm323 = vcmp.lt.s32.totalorder %v322, 2
  %vm324 = vcmp.eq.s32.totalorder %v322, 0
  %v325 = vxor.u32 %v320, 2147483648
  %v326 = vsel %vm324, %v312, %v325
  %vm327 = vcmp.eq.s32.totalorder %v322, 2
  %v328 = vxor.u32 %v312, 2147483648
  %v329 = vsel %vm327, %v328, %v320
  %v330 = vsel %vm323, %v326, %v329
  %v331 = vsel %vm321, nan, %v330
  %332 = vst [vmem:[%s2 + $0x8] sm:$0xff] %v331
  // Predicated region
  $region10: #{time_embedding.1} parent=0 // pred_check
    _
  $region11: #{time_embedding.1} parent=0 // pred_check_branch
    %334 = sbr.rel (0) target = $region13
  $region12: #{time_embedding.1} parent=0 // pred_region
    _
  $region13: #{time_embedding.1} parent=0 // pred_fallthru
    _
  // Predicated region
  $region14: #{time_embedding.1} parent=0 // pred_check
    _
  $region15: #{time_embedding.1} parent=0 // pred_check_branch
    %336 = sbr.rel (0) target = $region17
  $region16: #{time_embedding.1} parent=0 // pred_region
    _
  $region17: #{time_embedding.1} parent=0 // pred_fallthru
    _

</llo_original>
